<compile_context>
chip_gen: v5e
topology: v5e:2x2
jax: 0.10.0
libtpu: 0.0.40
codegen_flags: <defaults>
</compile_context>

<pallas_src>
import jax
import jax.numpy as jnp
from jax.experimental import pallas as pl
from jax.experimental.pallas import tpu as pltpu


# ---------------------------------------------------------------------------
# Pallas kernel: channel-major attention gate on one (batch, pixel-tile) block
# ---------------------------------------------------------------------------
def _attention_gate_kernel(g_ref, x_ref, wg_ref, wx_ref, b_ref, wpsi_ref,
                           bpsi_ref, o_ref):
    # g_ref   : (f_g, TP)   channel-major tile of g pixels
    # x_ref   : (f_l, TP)   channel-major tile of x pixels
    # wg_ref  : (f_int, f_g)   BN-folded conv weight (PyTorch layout)
    # wx_ref  : (f_int, f_l)
    # b_ref   : (f_int, 1)     combined folded bias (bg + bx)
    # wpsi_ref: (f_int, 1)     folded psi conv weight (transposed to column)
    # bpsi_ref: (1, 1)         folded psi bias
    # o_ref   : (f_l, TP)
    x = x_ref[...]
    a = (jnp.dot(wg_ref[...], g_ref[...], preferred_element_type=jnp.float32)
         + jnp.dot(wx_ref[...], x.astype(jnp.float32),
                   preferred_element_type=jnp.float32)
         + b_ref[...])
    a = jnp.maximum(a, 0.0)                                   # ReLU, (f_int, TP)
    # psi as a sublane (channel) reduction -> lane-dense (1, TP)
    psi = jnp.sum(a * wpsi_ref[...], axis=0, keepdims=True) + bpsi_ref[...]
    psi = jax.nn.sigmoid(psi)                                 # (1, TP)
    o_ref[...] = (psi * x.astype(jnp.float32)).astype(o_ref.dtype)


# ---------------------------------------------------------------------------
# BN folding (eval mode) for a 1x1 conv stored PyTorch-style: (C_out, C_in)
# ---------------------------------------------------------------------------
def _fold_bn(conv_w, conv_b, gamma, beta, mean, var, eps=1e-5):
    scale = gamma / jnp.sqrt(var + eps)                       # (C_out,)
    w_folded = conv_w * scale[:, None]                        # (C_out, C_in)
    b_folded = (conv_b - mean) * scale + beta                 # (C_out,)
    return w_folded, b_folded


def _pick_tile(spatial, max_tile):
    """Full extent if it fits, else a lane-aligned max tile (tail is masked)."""
    if spatial <= max_tile:
        return spatial
    return max_tile                                           # multiple of 128


# ---------------------------------------------------------------------------
# Wrapper
# ---------------------------------------------------------------------------
def attention_block(g, x, params, *, max_tile=8192):
    """g: (N, f_g, H, W), x: (N, f_l, H, W) -> (N, f_l, H, W), all NCHW."""
    N, f_g, H, W = g.shape
    f_l = x.shape[1]
    f_int = params["wg"].shape[0]
    S = H * W
    P = N * S
    assert max_tile % 128 == 0

    tile_p = _pick_tile(S, max_tile)
    n_s = pl.cdiv(S, tile_p)

    # Free reshapes: NCHW -> (N, C, H*W), channel-major, pixels on lane axis.
    g3 = g.reshape(N, f_g, S)
    x3 = x.reshape(N, f_l, S)

    # Fold eval-mode BN into the 1x1 convs; combine the two branch biases.
    wg_f, bg_f = _fold_bn(params["wg"], params["bg"], params["bn_g_gamma"],
                          params["bn_g_beta"], params["bn_g_mean"],
                          params["bn_g_var"])
    wx_f, bx_f = _fold_bn(params["wx"], params["bx"], params["bn_x_gamma"],
                          params["bn_x_beta"], params["bn_x_mean"],
                          params["bn_x_var"])
    wpsi_f, bpsi_f = _fold_bn(params["wpsi"], params["bpsi"],
                              params["bn_p_gamma"], params["bn_p_beta"],
                              params["bn_p_mean"], params["bn_p_var"])

    b_comb = (bg_f + bx_f).reshape(f_int, 1)
    wpsi_col = wpsi_f.reshape(1, f_int).T                     # (f_int, 1)
    bpsi_k = bpsi_f.reshape(1, 1)

    itemsize = jnp.dtype(x.dtype).itemsize
    cost = pl.CostEstimate(
        flops=2 * P * f_int * (f_g + f_l + 1),
        transcendentals=P,                                     # sigmoid
        bytes_accessed=itemsize * P * (f_g + 2 * f_l)
        + 4 * f_int * (f_g + f_l + 2),
    )

    out3 = pl.pallas_call(
        _attention_gate_kernel,
        out_shape=jax.ShapeDtypeStruct((N, f_l, S), x.dtype),
        grid_spec=pltpu.PrefetchScalarGridSpec(
            num_scalar_prefetch=0,
            grid=(N, n_s),
            in_specs=[
                pl.BlockSpec((None, f_g, tile_p), lambda n, s: (n, 0, s)),  # g
                pl.BlockSpec((None, f_l, tile_p), lambda n, s: (n, 0, s)),  # x
                pl.BlockSpec((f_int, f_g), lambda n, s: (0, 0)),            # wg
                pl.BlockSpec((f_int, f_l), lambda n, s: (0, 0)),            # wx
                pl.BlockSpec((f_int, 1), lambda n, s: (0, 0)),              # bias
                pl.BlockSpec((f_int, 1), lambda n, s: (0, 0)),              # wpsi
                pl.BlockSpec((1, 1), lambda n, s: (0, 0)),                  # bpsi
            ],
            out_specs=pl.BlockSpec((None, f_l, tile_p), lambda n, s: (n, 0, s)),
        ),
        compiler_params=pltpu.CompilerParams(
            dimension_semantics=("parallel", "parallel")),
        cost_estimate=cost,
    )(g3, x3, wg_f, wx_f, b_comb, wpsi_col, bpsi_k)

    return out3.reshape(N, f_l, H, W)                         # free reshape


# ---------------------------------------------------------------------------
# Pure-JAX reference (same eval-mode math) for correctness check
# ---------------------------------------------------------------------------
def attention_block_ref(g, x, params):
    wg, bg = _fold_bn(params["wg"], params["bg"], params["bn_g_gamma"],
                      params["bn_g_beta"], params["bn_g_mean"],
                      params["bn_g_var"])
    wx, bx = _fold_bn(params["wx"], params["bx"], params["bn_x_gamma"],
                      params["bn_x_beta"], params["bn_x_mean"],
                      params["bn_x_var"])
    wpsi, bpsi = _fold_bn(params["wpsi"], params["bpsi"], params["bn_p_gamma"],
                          params["bn_p_beta"], params["bn_p_mean"],
                          params["bn_p_var"])
    g1 = jnp.einsum("oi,nihw->nohw", wg, g) + bg[None, :, None, None]
    x1 = jnp.einsum("oi,nihw->nohw", wx, x) + bx[None, :, None, None]
    a = jnp.maximum(g1 + x1, 0.0)
    psi = jax.nn.sigmoid(jnp.einsum("oi,nihw->nohw", wpsi, a)
                         + bpsi[None, :, None, None])
    return psi * x


# ---------------------------------------------------------------------------
# Deterministic parameter init (PyTorch-native weight layouts)
# ---------------------------------------------------------------------------
def make_params(key, f_g, f_l, f_int):
    ks = jax.random.split(key, 12)

    def u(k, shape, scale=0.1):
        return jax.random.uniform(k, shape, jnp.float32, -scale, scale)

    return {
        # Conv2d 1x1 weights with kernel dims squeezed: (C_out, C_in).
        "wg": u(ks[0], (f_int, f_g), 0.5), "bg": u(ks[1], (f_int,)),
        "wx": u(ks[2], (f_int, f_l), 0.5), "bx": u(ks[3], (f_int,)),
        "wpsi": u(ks[4], (1, f_int), 0.5), "bpsi": u(ks[5], (1,)),
        # BatchNorm (eval mode): affine + running stats.
        "bn_g_gamma": 1.0 + u(ks[6], (f_int,)), "bn_g_beta": u(ks[7], (f_int,)),
        "bn_g_mean": u(ks[8], (f_int,)), "bn_g_var": 1.0 + u(ks[8], (f_int,)) ** 2,
        "bn_x_gamma": 1.0 + u(ks[9], (f_int,)), "bn_x_beta": u(ks[10], (f_int,)),
        "bn_x_mean": u(ks[11], (f_int,)), "bn_x_var": 1.0 + u(ks[11], (f_int,)) ** 2,
        "bn_p_gamma": jnp.ones((1,), jnp.float32),
        "bn_p_beta": jnp.zeros((1,), jnp.float32),
        "bn_p_mean": jnp.zeros((1,), jnp.float32),
        "bn_p_var": jnp.ones((1,), jnp.float32),
    }


if __name__ == "__main__":
    # Small shapes consistent with the module: f_g = f_l = f_int = 8.
    N, f_g, f_l, f_int, H, W = 2, 8, 8, 8, 16, 16
    key = jax.random.PRNGKey(0)
    kg, kx, kp = jax.random.split(key, 3)
    g = jax.random.normal(kg, (N, f_g, H, W), jnp.float32)   # gating signal
    x = jax.random.normal(kx, (N, f_l, H, W), jnp.float32)   # skip features
    params = make_params(kp, f_g, f_l, f_int)

    out = attention_block(g, x, params)
    out = jax.block_until_ready(out)

    ref = attention_block_ref(g, x, params)
    assert out.shape == (N, f_l, H, W)
    assert jnp.allclose(out, ref, atol=1e-5, rtol=1e-5)

    print("KERNEL_OK")
</pallas_src>

<mosaic_0001>
module attributes {stable_mosaic.version = 11 : i64} {
  func.func @_attention_gate_kernel(%arg0: i32, %arg1: i32, %arg2: memref<1x8x256xf32, #tpu.memory_space<vmem>>, %arg3: memref<1x8x256xf32, #tpu.memory_space<vmem>>, %arg4: memref<8x8xf32, #tpu.memory_space<vmem>>, %arg5: memref<8x8xf32, #tpu.memory_space<vmem>>, %arg6: memref<8x1xf32, #tpu.memory_space<vmem>>, %arg7: memref<8x1xf32, #tpu.memory_space<vmem>>, %arg8: memref<1x1xf32, #tpu.memory_space<vmem>>, %arg9: memref<1x8x256xf32, #tpu.memory_space<vmem>>) attributes {dimension_semantics = [#tpu.dimension_semantics<parallel>, #tpu.dimension_semantics<parallel>], iteration_bounds = array<i64: 2, 1>, scalar_prefetch = 0 : i64, scratch_operands = 0 : i64, tpu.core_type = #tpu.core_type<tc>, window_params = [{transform_indices = @transform_0, window_bounds = array<i64: 1, 8, 256>}, {transform_indices = @transform_1, window_bounds = array<i64: 1, 8, 256>}, {pipeline_mode = #tpu.pipeline_mode<synchronous>, transform_indices = @transform_2, window_bounds = array<i64: 8, 8>}, {pipeline_mode = #tpu.pipeline_mode<synchronous>, transform_indices = @transform_3, window_bounds = array<i64: 8, 8>}, {pipeline_mode = #tpu.pipeline_mode<synchronous>, transform_indices = @transform_4, window_bounds = array<i64: 8, 1>}, {pipeline_mode = #tpu.pipeline_mode<synchronous>, transform_indices = @transform_5, window_bounds = array<i64: 8, 1>}, {pipeline_mode = #tpu.pipeline_mode<synchronous>, transform_indices = @transform_6, window_bounds = array<i64: 1, 1>}, {transform_indices = @transform_7, window_bounds = array<i64: 1, 8, 256>}]} {
    %c0 = arith.constant 0 : index
    %c0_0 = arith.constant 0 : index
    %c0_1 = arith.constant 0 : index
    %0 = vector.load %arg3[%c0, %c0_0, %c0_1] : memref<1x8x256xf32, #tpu.memory_space<vmem>>, vector<1x8x256xf32>
    %1 = vector.shape_cast %0 : vector<1x8x256xf32> to vector<8x256xf32>
    %c0_2 = arith.constant 0 : index
    %c0_3 = arith.constant 0 : index
    %2 = vector.load %arg4[%c0_2, %c0_3] : memref<8x8xf32, #tpu.memory_space<vmem>>, vector<8x8xf32>
    %c0_4 = arith.constant 0 : index
    %c0_5 = arith.constant 0 : index
    %c0_6 = arith.constant 0 : index
    %3 = vector.load %arg2[%c0_4, %c0_5, %c0_6] : memref<1x8x256xf32, #tpu.memory_space<vmem>>, vector<1x8x256xf32>
    %4 = vector.shape_cast %3 : vector<1x8x256xf32> to vector<8x256xf32>
    %cst = arith.constant dense<0.000000e+00> : vector<8x256xf32>
    %5 = tpu.matmul %2, %4, %cst {dimension_numbers = #tpu.dot_dimension_numbers<[1], [0], [0], [1], [0, 0, 1, 1], [], []>} : vector<8x8xf32>, vector<8x256xf32>, vector<8x256xf32> -> vector<8x256xf32>
    %c0_7 = arith.constant 0 : index
    %c0_8 = arith.constant 0 : index
    %6 = vector.load %arg5[%c0_7, %c0_8] : memref<8x8xf32, #tpu.memory_space<vmem>>, vector<8x8xf32>
    %cst_9 = arith.constant dense<0.000000e+00> : vector<8x256xf32>
    %7 = tpu.matmul %6, %1, %cst_9 {dimension_numbers = #tpu.dot_dimension_numbers<[1], [0], [0], [1], [0, 0, 1, 1], [], []>} : vector<8x8xf32>, vector<8x256xf32>, vector<8x256xf32> -> vector<8x256xf32>
    %8 = arith.addf %5, %7 : vector<8x256xf32>
    %c0_10 = arith.constant 0 : index
    %c0_11 = arith.constant 0 : index
    %9 = vector.load %arg6[%c0_10, %c0_11] : memref<8x1xf32, #tpu.memory_space<vmem>>, vector<8x1xf32>
    %10 = vector.broadcast %9 : vector<8x1xf32> to vector<8x256xf32>
    %11 = arith.addf %8, %10 : vector<8x256xf32>
    %cst_12 = arith.constant 0.000000e+00 : f32
    %12 = vector.broadcast %cst_12 : f32 to vector<8x256xf32>
    %13 = arith.maximumf %11, %12 : vector<8x256xf32>
    %c0_13 = arith.constant 0 : index
    %c0_14 = arith.constant 0 : index
    %14 = vector.load %arg7[%c0_13, %c0_14] : memref<8x1xf32, #tpu.memory_space<vmem>>, vector<8x1xf32>
    %15 = vector.broadcast %14 : vector<8x1xf32> to vector<8x256xf32>
    %16 = arith.mulf %13, %15 : vector<8x256xf32>
    %cst_15 = arith.constant dense<0.000000e+00> : vector<256xf32>
    %17 = vector.multi_reduction <add>, %16, %cst_15 [0] : vector<8x256xf32> to vector<256xf32>
    %18 = vector.shape_cast %17 : vector<256xf32> to vector<1x256xf32>
    %c0_16 = arith.constant 0 : index
    %c0_17 = arith.constant 0 : index
    %19 = vector.load %arg8[%c0_16, %c0_17] : memref<1x1xf32, #tpu.memory_space<vmem>>, vector<1x1xf32>
    %20 = vector.broadcast %19 : vector<1x1xf32> to vector<1x256xf32>
    %21 = arith.addf %18, %20 : vector<1x256xf32>
    %22 = arith.negf %21 : vector<1x256xf32>
    %23 = math.exp %22 : vector<1x256xf32>
    %cst_18 = arith.constant 1.000000e+00 : f32
    %24 = vector.broadcast %cst_18 : f32 to vector<1x256xf32>
    %25 = arith.addf %24, %23 : vector<1x256xf32>
    %26 = arith.divf %24, %25 : vector<1x256xf32>
    %27 = vector.broadcast %26 : vector<1x256xf32> to vector<8x256xf32>
    %28 = arith.mulf %27, %1 : vector<8x256xf32>
    %c0_19 = arith.constant 0 : index
    %c0_20 = arith.constant 0 : index
    %c0_21 = arith.constant 0 : index
    %29 = vector.load %arg9[%c0_19, %c0_20, %c0_21] : memref<1x8x256xf32, #tpu.memory_space<vmem>>, vector<1x8x256xf32>
    %30 = vector.shape_cast %29 : vector<1x8x256xf32> to vector<8x256xf32>
    %31 = vector.shape_cast %28 : vector<8x256xf32> to vector<1x8x256xf32>
    tpu.vector_store %arg9[%c0_19, %c0_20, %c0_21], %31 {strides = array<i32>} : memref<1x8x256xf32, #tpu.memory_space<vmem>>, vector<1x8x256xf32>,
    return
  }
  func.func @transform_0(%arg0: i32, %arg1: i32) -> (i32, i32, i32) {
    %c0_i32 = arith.constant 0 : i32
    %c0_i32_0 = arith.constant 0 : i32
    return %arg0, %c0_i32, %arg1 : i32, i32, i32
  }
  func.func @transform_1(%arg0: i32, %arg1: i32) -> (i32, i32, i32) {
    %c0_i32 = arith.constant 0 : i32
    %c0_i32_0 = arith.constant 0 : i32
    return %arg0, %c0_i32, %arg1 : i32, i32, i32
  }
  func.func @transform_2(%arg0: i32, %arg1: i32) -> (i32, i32) {
    %c0_i32 = arith.constant 0 : i32
    %c0_i32_0 = arith.constant 0 : i32
    %c0_i32_1 = arith.constant 0 : i32
    return %c0_i32, %c0_i32_0 : i32, i32
  }
  func.func @transform_3(%arg0: i32, %arg1: i32) -> (i32, i32) {
    %c0_i32 = arith.constant 0 : i32
    %c0_i32_0 = arith.constant 0 : i32
    %c0_i32_1 = arith.constant 0 : i32
    return %c0_i32, %c0_i32_0 : i32, i32
  }
  func.func @transform_4(%arg0: i32, %arg1: i32) -> (i32, i32) {
    %c0_i32 = arith.constant 0 : i32
    %c0_i32_0 = arith.constant 0 : i32
    %c0_i32_1 = arith.constant 0 : i32
    return %c0_i32, %c0_i32_0 : i32, i32
  }
  func.func @transform_5(%arg0: i32, %arg1: i32) -> (i32, i32) {
    %c0_i32 = arith.constant 0 : i32
    %c0_i32_0 = arith.constant 0 : i32
    %c0_i32_1 = arith.constant 0 : i32
    return %c0_i32, %c0_i32_0 : i32, i32
  }
  func.func @transform_6(%arg0: i32, %arg1: i32) -> (i32, i32) {
    %c0_i32 = arith.constant 0 : i32
    %c0_i32_0 = arith.constant 0 : i32
    %c0_i32_1 = arith.constant 0 : i32
    return %c0_i32, %c0_i32_0 : i32, i32
  }
  func.func @transform_7(%arg0: i32, %arg1: i32) -> (i32, i32, i32) {
    %c0_i32 = arith.constant 0 : i32
    %c0_i32_0 = arith.constant 0 : i32
    return %arg0, %c0_i32, %arg1 : i32, i32, i32
  }
}

</mosaic_0001>

<llo_original>
// kernel: tpu_custom_call.1
$region0: #{tpu_custom_call.1}
  #allocation0 [shape = 'u32[]', space=smem, size = 0x4, offset = 0x4, fixed_abs, tag = 'smem constant byte address 0x4 - core index']
  #allocation1 [shape = 'u32[72,128]{1,0:T(1,128)}', space=vmem, size = 0x9000, scoped, tag = 'internal scratch']
  #allocation2 [shape = 'f32[1,1]{1,0:T(1,128)S(1)}', space=vmem, size = 0x200, scoped, tag = 'scoped memory for tpu_custom_call.1']
  %s0 = inlined_call_operand.hbm [shape: f32[2,8,256], index: 0, kind: input, shape index: {}]
  %s1 = inlined_call_operand.hbm [shape: f32[2,8,256], index: 1, kind: input, shape index: {}]
  %s2 = inlined_call_operand.vmem [shape: f32[8,8], index: 2, kind: input, shape index: {}]
  %s3 = inlined_call_operand.vmem [shape: f32[8,8], index: 3, kind: input, shape index: {}]
  %s4 = inlined_call_operand.vmem [shape: f32[8,1], index: 4, kind: input, shape index: {}]
  %s5 = inlined_call_operand.vmem [shape: f32[8,1], index: 5, kind: input, shape index: {}]
  %s6 = inlined_call_operand.<no memory space> [shape: f32[1,1], index: 6, kind: input, shape index: {}]
  %s7 = inlined_call_operand.hbm [shape: f32[2,8,256], index: 7, kind: output, shape index: {}]
  %s8 = sld [smem:[#allocation0]]
  $region69: #{tpu_custom_call.1} parent=0
    _
  %s10 = ssub.s32 1, %s8
  %s11 = scalar_select 0, %s10, %s8
  %v12 = vstv %s6
  %13 = vst [vmem:[#allocation2] sm:$0x1] %v12
  $region1: #{tpu_custom_call.1} parent=0
    #allocation3 [shape = 'u8[16384]{0}', space=vmem, size = 0x4000, scoped, tag = 'input window, operand 0']
    #allocation4 [shape = 's32[2]{0}', space=sflag, size = 0x8, scoped, tag = 'scoped memory for tpu_custom_call.1']
    #allocation5 [shape = 's32[2]{0}', space=sflag, size = 0x8, scoped, tag = 'scoped memory for tpu_custom_call.1']
    #allocation6 [shape = 'u8[16384]{0}', space=vmem, size = 0x4000, scoped, tag = 'input window, operand 1']
    #allocation7 [shape = 's32[2]{0}', space=sflag, size = 0x8, scoped, tag = 'scoped memory for tpu_custom_call.1']
    #allocation8 [shape = 'u8[16384]{0}', space=vmem, size = 0x4000, scoped, tag = 'output window, operand 0']
    %14 = vsyncpa [#allocation4], 0
    %s15 = scalar_lea.sflag [#allocation4], 1
    %16 = vsyncpa %s15, 0
    %17 = vsyncpa [#allocation7], 0
    %s18 = scalar_lea.sflag [#allocation7], 1
    %19 = vsyncpa %s18, 0
    %20 = vsyncpa [#allocation5], 0
    %s21 = scalar_lea.sflag [#allocation5], 1
    %22 = vsyncpa %s21, 0
    loop: start=0, step=1, limit=4
    $region2: #{tpu_custom_call.1} parent=1 // loop_pre_header
      _
    $region3: #{tpu_custom_call.1} parent=1 // loop_header
      %s24 = sphi 0, %s28
      %p25 = scmp.ge.s32.totalorder %s24, 4
      %s31 = sphi 0, %s43
      %s32 = sphi 0, %s39
      %s33 = sphi 0, %s31
      %s34 = sphi 0, %s32
      %s35 = sphi 0, %s33
      %s36 = sphi 0, %s34
      %s48 = sphi 0, %s50
      %s51 = sphi 0, %s48
      %s52 = sphi 0, %s51
      %s68 = sphi 0, %s52
      %s76 = sphi 0, %s78
      %s79 = sphi 0, %s76
      %s80 = sphi 0, %s79
      %s96 = sphi 0, %s80
      %s100 = sphi 0, %s100
      %s102 = sphi 0, %s100
      %s103 = sphi 0, %s102
      %s117 = sphi 0, %s103
      %s121 = sphi 0, %s121
      %s123 = sphi 0, %s121
      %s124 = sphi 0, %s123
      %s138 = sphi 0, %s124
      %s142 = sphi 0, %s142
      %s144 = sphi 0, %s142
      %s145 = sphi 0, %s144
      %s159 = sphi 0, %s145
      %s163 = sphi 0, %s163
      %s165 = sphi 0, %s163
      %s166 = sphi 0, %s165
      %s180 = sphi 0, %s166
      %s184 = sphi 0, %s184
      %s186 = sphi 0, %s184
      %s187 = sphi 0, %s186
      %s201 = sphi 0, %s187
      %s209 = sphi 0, %s211
      %s212 = sphi 0, %s209
      %s213 = sphi 0, %s212
      %s229 = sphi 0, %s213
    $region4: #{tpu_custom_call.1} parent=1 // loop_header_branch
      %27 = sbr.rel (%p25) target = $region8
    $region5: #{tpu_custom_call.1} parent=1 // loop_body
      %s29 = ssub.s32 %s24, 1
      %s30 = ssub.s32 %s24, 2
      %s37 = sadd.s32 1, %s32
      %p38 = scmp.ge.s32.totalorder %s37, 1
      %s39 = scalar_select %p38, 0, %s37
      %s40 = sadd.s32 1, %s31
      %s41 = scalar_select %p38, %s40, %s31
      %p42 = scmp.ge.s32.totalorder %s41, 2
      %s43 = scalar_select %p42, 0, %s41
      %s44 = ssub.s32 %s31, %s43
      %s45 = ssub.s32 %s32, %s39
      %s46 = sor.u32 %s44, %s45
      %p47 = scmp.eq.s32.totalorder %s46, 0
      %s49 = sadd.s32 %s48, 1
      %s50 = scalar_select %p47, %s48, %s49
      %p53 = pneg %p47
      %p54 = scmp.eq.s32.totalorder %s24, 1
      %p55 = por %p53, %p54
      %p56 = scmp.ne.s32.totalorder %s48, %s51
      %p57 = scmp.eq.s32.totalorder %s24, 0
      %p58 = por %p56, %p57
      %p59 = scmp.ne.s32.totalorder %s48, %s51
      %p60 = scmp.eq.s32.totalorder %s29, 1
      %p61 = por %p59, %p60
      %p62 = scmp.ne.s32.totalorder %s51, %s52
      %p63 = scmp.eq.s32.totalorder %s29, 0
      %p64 = por %p62, %p63
      %p65 = scmp.ne.s32.totalorder %s51, %s52
      %p66 = scmp.eq.s32.totalorder %s30, 1
      %p67 = por %p65, %p66
      %p69 = scmp.ne.s32.totalorder %s52, %s68
      %p70 = scmp.eq.s32.totalorder %s30, 0
      %p71 = por %p69, %p70
      %s72 = ssub.s32 %s31, %s43
      %s73 = ssub.s32 %s32, %s39
      %s74 = sor.u32 %s72, %s73
      %p75 = scmp.eq.s32.totalorder %s74, 0
      %s77 = sadd.s32 %s76, 1
      %s78 = scalar_select %p75, %s76, %s77
      %p81 = pneg %p75
      %p82 = scmp.eq.s32.totalorder %s24, 1
      %p83 = por %p81, %p82
      %p84 = scmp.ne.s32.totalorder %s76, %s79
      %p85 = scmp.eq.s32.totalorder %s24, 0
      %p86 = por %p84, %p85
      %p87 = scmp.ne.s32.totalorder %s76, %s79
      %p88 = scmp.eq.s32.totalorder %s29, 1
      %p89 = por %p87, %p88
      %p90 = scmp.ne.s32.totalorder %s79, %s80
      %p91 = scmp.eq.s32.totalorder %s29, 0
      %p92 = por %p90, %p91
      %p93 = scmp.ne.s32.totalorder %s79, %s80
      %p94 = scmp.eq.s32.totalorder %s30, 1
      %p95 = por %p93, %p94
      %p97 = scmp.ne.s32.totalorder %s80, %s96
      %p98 = scmp.eq.s32.totalorder %s30, 0
      %p99 = por %p97, %p98
      %s101 = sadd.s32 %s100, 1
      %p104 = scmp.eq.s32.totalorder %s24, 1
      %p105 = scmp.ne.s32.totalorder %s100, %s102
      %p106 = scmp.eq.s32.totalorder %s24, 0
      %p107 = por %p105, %p106
      %p108 = scmp.ne.s32.totalorder %s100, %s102
      %p109 = scmp.eq.s32.totalorder %s29, 1
      %p110 = por %p108, %p109
      %p111 = scmp.ne.s32.totalorder %s102, %s103
      %p112 = scmp.eq.s32.totalorder %s29, 0
      %p113 = por %p111, %p112
      %p114 = scmp.ne.s32.totalorder %s102, %s103
      %p115 = scmp.eq.s32.totalorder %s30, 1
      %p116 = por %p114, %p115
      %p118 = scmp.ne.s32.totalorder %s103, %s117
      %p119 = scmp.eq.s32.totalorder %s30, 0
      %p120 = por %p118, %p119
      %s122 = sadd.s32 %s121, 1
      %p125 = scmp.eq.s32.totalorder %s24, 1
      %p126 = scmp.ne.s32.totalorder %s121, %s123
      %p127 = scmp.eq.s32.totalorder %s24, 0
      %p128 = por %p126, %p127
      %p129 = scmp.ne.s32.totalorder %s121, %s123
      %p130 = scmp.eq.s32.totalorder %s29, 1
      %p131 = por %p129, %p130
      %p132 = scmp.ne.s32.totalorder %s123, %s124
      %p133 = scmp.eq.s32.totalorder %s29, 0
      %p134 = por %p132, %p133
      %p135 = scmp.ne.s32.totalorder %s123, %s124
      %p136 = scmp.eq.s32.totalorder %s30, 1
      %p137 = por %p135, %p136
      %p139 = scmp.ne.s32.totalorder %s124, %s138
      %p140 = scmp.eq.s32.totalorder %s30, 0
      %p141 = por %p139, %p140
      %s143 = sadd.s32 %s142, 1
      %p146 = scmp.eq.s32.totalorder %s24, 1
      %p147 = scmp.ne.s32.totalorder %s142, %s144
      %p148 = scmp.eq.s32.totalorder %s24, 0
      %p149 = por %p147, %p148
      %p150 = scmp.ne.s32.totalorder %s142, %s144
      %p151 = scmp.eq.s32.totalorder %s29, 1
      %p152 = por %p150, %p151
      %p153 = scmp.ne.s32.totalorder %s144, %s145
      %p154 = scmp.eq.s32.totalorder %s29, 0
      %p155 = por %p153, %p154
      %p156 = scmp.ne.s32.totalorder %s144, %s145
      %p157 = scmp.eq.s32.totalorder %s30, 1
      %p158 = por %p156, %p157
      %p160 = scmp.ne.s32.totalorder %s145, %s159
      %p161 = scmp.eq.s32.totalorder %s30, 0
      %p162 = por %p160, %p161
      %s164 = sadd.s32 %s163, 1
      %p167 = scmp.eq.s32.totalorder %s24, 1
      %p168 = scmp.ne.s32.totalorder %s163, %s165
      %p169 = scmp.eq.s32.totalorder %s24, 0
      %p170 = por %p168, %p169
      %p171 = scmp.ne.s32.totalorder %s163, %s165
      %p172 = scmp.eq.s32.totalorder %s29, 1
      %p173 = por %p171, %p172
      %p174 = scmp.ne.s32.totalorder %s165, %s166
      %p175 = scmp.eq.s32.totalorder %s29, 0
      %p176 = por %p174, %p175
      %p177 = scmp.ne.s32.totalorder %s165, %s166
      %p178 = scmp.eq.s32.totalorder %s30, 1
      %p179 = por %p177, %p178
      %p181 = scmp.ne.s32.totalorder %s166, %s180
      %p182 = scmp.eq.s32.totalorder %s30, 0
      %p183 = por %p181, %p182
      %s185 = sadd.s32 %s184, 1
      %p188 = scmp.eq.s32.totalorder %s24, 1
      %p189 = scmp.ne.s32.totalorder %s184, %s186
      %p190 = scmp.eq.s32.totalorder %s24, 0
      %p191 = por %p189, %p190
      %p192 = scmp.ne.s32.totalorder %s184, %s186
      %p193 = scmp.eq.s32.totalorder %s29, 1
      %p194 = por %p192, %p193
      %p195 = scmp.ne.s32.totalorder %s186, %s187
      %p196 = scmp.eq.s32.totalorder %s29, 0
      %p197 = por %p195, %p196
      %p198 = scmp.ne.s32.totalorder %s186, %s187
      %p199 = scmp.eq.s32.totalorder %s30, 1
      %p200 = por %p198, %p199
      %p202 = scmp.ne.s32.totalorder %s187, %s201
      %p203 = scmp.eq.s32.totalorder %s30, 0
      %p204 = por %p202, %p203
      %s205 = ssub.s32 %s31, %s43
      %s206 = ssub.s32 %s32, %s39
      %s207 = sor.u32 %s205, %s206
      %p208 = scmp.eq.s32.totalorder %s207, 0
      %s210 = sadd.s32 %s209, 1
      %s211 = scalar_select %p208, %s209, %s210
      %p214 = pneg %p208
      %p215 = scmp.eq.s32.totalorder %s24, 1
      %p216 = por %p214, %p215
      %p217 = scmp.ne.s32.totalorder %s209, %s212
      %p218 = scmp.eq.s32.totalorder %s24, 0
      %p219 = por %p217, %p218
      %p220 = scmp.ne.s32.totalorder %s209, %s212
      %p221 = scmp.eq.s32.totalorder %s29, 1
      %p222 = por %p220, %p221
      %p223 = scmp.ne.s32.totalorder %s212, %s213
      %p224 = scmp.eq.s32.totalorder %s29, 0
      %p225 = por %p223, %p224
      %p226 = scmp.ne.s32.totalorder %s212, %s213
      %p227 = scmp.eq.s32.totalorder %s30, 1
      %p228 = por %p226, %p227
      %p230 = scmp.ne.s32.totalorder %s213, %s229
      %p231 = scmp.eq.s32.totalorder %s30, 0
      %p232 = por %p230, %p231
      %p233 = scmp.le.s32.totalorder 1, %s24
      %p234 = scmp.lt.s32.totalorder %s24, 3
      %p235 = pnand %p233, %p234
      %p236 = pneg %p235
      // Predicated region
      $region9: #{tpu_custom_call.1} parent=5 // pred_check
        _
      $region10: #{tpu_custom_call.1} parent=5 // pred_check_branch
        %238 = sbr.rel (%p235) target = $region12
      $region11: #{tpu_custom_call.1} parent=5 // pred_region
        %s239 = ssub.s32 %s24, 1
        // Predicated region
        $region13: #{tpu_custom_call.1} parent=11 // pred_check
          %p240 = pneg %p113
        $region14: #{tpu_custom_call.1} parent=11 // pred_check_branch
          %242 = sbr.rel (%p240) target = $region16
        $region15: #{tpu_custom_call.1} parent=11 // pred_region
          _
        $region16: #{tpu_custom_call.1} parent=11 // pred_fallthru
          _
        // Predicated region
        $region17: #{tpu_custom_call.1} parent=11 // pred_check
          %p243 = pneg %p134
        $region18: #{tpu_custom_call.1} parent=11 // pred_check_branch
          %245 = sbr.rel (%p243) target = $region20
        $region19: #{tpu_custom_call.1} parent=11 // pred_region
          _
        $region20: #{tpu_custom_call.1} parent=11 // pred_fallthru
          _
        // Predicated region
        $region21: #{tpu_custom_call.1} parent=11 // pred_check
          %p246 = pneg %p155
        $region22: #{tpu_custom_call.1} parent=11 // pred_check_branch
          %248 = sbr.rel (%p246) target = $region24
        $region23: #{tpu_custom_call.1} parent=11 // pred_region
          _
        $region24: #{tpu_custom_call.1} parent=11 // pred_fallthru
          _
        // Predicated region
        $region25: #{tpu_custom_call.1} parent=11 // pred_check
          %p249 = pneg %p176
        $region26: #{tpu_custom_call.1} parent=11 // pred_check_branch
          %251 = sbr.rel (%p249) target = $region28
        $region27: #{tpu_custom_call.1} parent=11 // pred_region
          _
        $region28: #{tpu_custom_call.1} parent=11 // pred_fallthru
          _
        // Predicated region
        $region29: #{tpu_custom_call.1} parent=11 // pred_check
          %p252 = pneg %p197
        $region30: #{tpu_custom_call.1} parent=11 // pred_check_branch
          %254 = sbr.rel (%p252) target = $region32
        $region31: #{tpu_custom_call.1} parent=11 // pred_region
          _
        $region32: #{tpu_custom_call.1} parent=11 // pred_fallthru
          _
      $region12: #{tpu_custom_call.1} parent=5 // pred_fallthru
        _
      %p255 = scmp.lt.s32.totalorder %s24, 2
      // Predicated region
      $region33: #{tpu_custom_call.1} parent=5 // pred_check
        %p256 = pneg %p255
      $region34: #{tpu_custom_call.1} parent=5 // pred_check_branch
        %258 = sbr.rel (%p256) target = $region36
      $region35: #{tpu_custom_call.1} parent=5 // pred_region
        // Predicated region
        $region37: #{tpu_custom_call.1} parent=35 // pred_check
          %p259 = pneg %p58
        $region38: #{tpu_custom_call.1} parent=35 // pred_check_branch
          %261 = sbr.rel (%p259) target = $region40
        $region39: #{tpu_custom_call.1} parent=35 // pred_region
          %s262 = sand.u32 %s48, 1
          %s263 = scalar_lea.sflag [#allocation4], %s262
          %s264 = sand.u32 %s48, 1
          %s265 = smul.addr %s264, 16
          %s266 = scalar_lea.vmem [#allocation3], %s265
          %s267 = smul.u32 2, %s32
          %269 = vsyncadd %s263, 0
          %s270 = smul.addr %s31, 2
          %s271 = sadd.s32 %s267, %s270
          %s272 = smul.addr %s271, 8
          %s273 = scalar_lea.hbm %s0, %s272
          %s275 = sshll.u32 %s273, 4
          %s276 = int_to_ptr.hbm [resolvable:$true] %s275
          %s277 = sshll.u32 %s266, 4
          %s278 = int_to_ptr.vmem [resolvable:$true] %s277
          %280 = dma.hbm_to_vmem [thread:$0]  %s276, 256, %s278, %s263
        $region40: #{tpu_custom_call.1} parent=35 // pred_fallthru
          _
        // Predicated region
        $region41: #{tpu_custom_call.1} parent=35 // pred_check
          %p281 = pneg %p86
        $region42: #{tpu_custom_call.1} parent=35 // pred_check_branch
          %283 = sbr.rel (%p281) target = $region44
        $region43: #{tpu_custom_call.1} parent=35 // pred_region
          %s284 = sand.u32 %s76, 1
          %s285 = scalar_lea.sflag [#allocation7], %s284
          %s286 = sand.u32 %s76, 1
          %s287 = smul.addr %s286, 16
          %s288 = scalar_lea.vmem [#allocation6], %s287
          %s289 = smul.u32 2, %s32
          %291 = vsyncadd %s285, 0
          %s292 = smul.addr %s31, 2
          %s293 = sadd.s32 %s289, %s292
          %s294 = smul.addr %s293, 8
          %s295 = scalar_lea.hbm %s1, %s294
          %s297 = sshll.u32 %s295, 4
          %s298 = int_to_ptr.hbm [resolvable:$true] %s297
          %s299 = sshll.u32 %s288, 4
          %s300 = int_to_ptr.vmem [resolvable:$true] %s299
          %302 = dma.hbm_to_vmem [thread:$0]  %s298, 256, %s300, %s285
        $region44: #{tpu_custom_call.1} parent=35 // pred_fallthru
          _
      $region36: #{tpu_custom_call.1} parent=5 // pred_fallthru
        _
      %p303 = scmp.le.s32.totalorder 1, %s24
      %p304 = scmp.lt.s32.totalorder %s24, 3
      %p305 = pnand %p303, %p304
      %p306 = pneg %p305
      // Predicated region
      $region45: #{tpu_custom_call.1} parent=5 // pred_check
        _
      $region46: #{tpu_custom_call.1} parent=5 // pred_check_branch
        %308 = sbr.rel (%p305) target = $region48
      $region47: #{tpu_custom_call.1} parent=5 // pred_region
        %s309 = ssub.s32 %s24, 1
        %s310 = sand.u32 %s51, 1
        %s311 = scalar_lea.sflag [#allocation4], %s310
        %s312 = sand.u32 %s51, 1
        %s313 = smul.addr %s312, 16
        %s314 = scalar_lea.vmem [#allocation3], %s313
        // Predicated region
        $region49: #{tpu_custom_call.1} parent=47 // pred_check
          %p315 = pneg %p64
        $region50: #{tpu_custom_call.1} parent=47 // pred_check_branch
          %317 = sbr.rel (%p315) target = $region52
        $region51: #{tpu_custom_call.1} parent=47 // pred_region
          %319 = dma.done %s311, 256
        $region52: #{tpu_custom_call.1} parent=47 // pred_fallthru
          _
        %s320 = sand.u32 %s79, 1
        %s321 = scalar_lea.sflag [#allocation7], %s320
        %s322 = sand.u32 %s79, 1
        %s323 = smul.addr %s322, 16
        %s324 = scalar_lea.vmem [#allocation6], %s323
        // Predicated region
        $region53: #{tpu_custom_call.1} parent=47 // pred_check
          %p325 = pneg %p92
        $region54: #{tpu_custom_call.1} parent=47 // pred_check_branch
          %327 = sbr.rel (%p325) target = $region56
        $region55: #{tpu_custom_call.1} parent=47 // pred_region
          %329 = dma.done %s321, 256
        $region56: #{tpu_custom_call.1} parent=47 // pred_fallthru
          _
        %s330 = sand.u32 %s51, 1
        %s331 = scalar_lea.sflag [#allocation4], %s330
        %s332 = sand.u32 %s51, 1
        %s333 = smul.addr %s332, 16
        %s334 = scalar_lea.vmem [#allocation3], %s333
        %p335 = pneg %p64
        %p336 = pneg %p61
        %s337 = sand.u32 %s79, 1
        %s338 = scalar_lea.sflag [#allocation7], %s337
        %s339 = sand.u32 %s79, 1
        %s340 = smul.addr %s339, 16
        %s341 = scalar_lea.vmem [#allocation6], %s340
        %p342 = pneg %p92
        %p343 = pneg %p89
        %p344 = pneg %p113
        %p345 = pneg %p110
        %p346 = pneg %p134
        %p347 = pneg %p131
        %p348 = pneg %p155
        %p349 = pneg %p152
        %p350 = pneg %p176
        %p351 = pneg %p173
        %p352 = pneg %p197
        %p353 = pneg %p194
        %p354 = pneg %p225
        %p355 = pneg %p222
        %s356 = sand.u32 %s212, 1
        %s357 = scalar_lea.sflag [#allocation5], %s356
        %s358 = sand.u32 %s212, 1
        %s359 = smul.addr %s358, 16
        %s360 = scalar_lea.vmem [#allocation8], %s359
        %s361 = smul.u32 2, %s34
        %s362 = smul.u32 2, %s34
        %s363 = smul.u32 2, %s34
        %v364 = vld [vmem:[%s324] sm:$0xff]
        %v365 = vld [vmem:[%s324 + $0x8] sm:$0xff]
        %v366 = vld [vmem:[%s2] sm:$0xff]
        %v367 = vld [vmem:[%s314] sm:$0xff]
        %v368 = vld [vmem:[%s314 + $0x8] sm:$0xff]
        %v369 = vld [vmem:[%s3] sm:$0xff]
        %vm370 = vcmask 64512
        %v372 = vsel %vm370, %v369, 0
        %374 = vmatpush.msra.mxu0 0.0
        %375 = vmatpush.msra.mxu0 0.0
        %376 = vmatpush.msra.mxu0 0.0
        %377 = vmatpush.msra.mxu0 0.0
        %378 = vmatpush.msra.mxu0 0.0
        %379 = vmatpush.msra.mxu0 0.0
        %380 = vmatpush.msra.mxu0 0.0
        %381 = vmatpush.msra.mxu0 0.0
        %382 = vmatpush.msra.mxu0 0.0
        %383 = vmatpush.msra.mxu0 0.0
        %384 = vmatpush.msra.mxu0 0.0
        %385 = vmatpush.msra.mxu0 0.0
        %386 = vmatpush.msra.mxu0 0.0
        %387 = vmatpush.msra.mxu0 0.0
        %388 = vmatpush.msra.mxu0 0.0
        %389 = vmatpush.msra.mxu0 %v364
        %390 = vmatmul.f32.gmra.mxu0 %v372
        %v391 = vpop.f32.mrf.mxu0
        %v392 = vadd.f32 0.0, %v391
        %393 = vdwg.mxu0
        %394 = vmatpush.msra.mxu0 0.0
        %395 = vmatpush.msra.mxu0 0.0
        %396 = vmatpush.msra.mxu0 0.0
        %397 = vmatpush.msra.mxu0 0.0
        %398 = vmatpush.msra.mxu0 0.0
        %399 = vmatpush.msra.mxu0 0.0
        %400 = vmatpush.msra.mxu0 0.0
        %401 = vmatpush.msra.mxu0 0.0
        %402 = vmatpush.msra.mxu0 0.0
        %403 = vmatpush.msra.mxu0 0.0
        %404 = vmatpush.msra.mxu0 0.0
        %405 = vmatpush.msra.mxu0 0.0
        %406 = vmatpush.msra.mxu0 0.0
        %407 = vmatpush.msra.mxu0 0.0
        %408 = vmatpush.msra.mxu0 0.0
        %409 = vmatpush.msra.mxu0 %v365
        %410 = vmatmul.f32.gmra.mxu0 %v372
        %v411 = vpop.f32.mrf.mxu0
        %v412 = vadd.f32 0.0, %v411
        %413 = vdwg.mxu0
        %v415 = vsel %vm370, %v366, 0
        %417 = vmatpush.msra.mxu0 0.0
        %418 = vmatpush.msra.mxu0 0.0
        %419 = vmatpush.msra.mxu0 0.0
        %420 = vmatpush.msra.mxu0 0.0
        %421 = vmatpush.msra.mxu0 0.0
        %422 = vmatpush.msra.mxu0 0.0
        %423 = vmatpush.msra.mxu0 0.0
        %424 = vmatpush.msra.mxu0 0.0
        %425 = vmatpush.msra.mxu0 0.0
        %426 = vmatpush.msra.mxu0 0.0
        %427 = vmatpush.msra.mxu0 0.0
        %428 = vmatpush.msra.mxu0 0.0
        %429 = vmatpush.msra.mxu0 0.0
        %430 = vmatpush.msra.mxu0 0.0
        %431 = vmatpush.msra.mxu0 0.0
        %432 = vmatpush.msra.mxu0 %v367
        %433 = vmatmul.f32.gmra.mxu0 %v415
        %v434 = vpop.f32.mrf.mxu0
        %v435 = vadd.f32 %v392, %v434
        %436 = vdwg.mxu0
        %437 = vmatpush.msra.mxu0 0.0
        %438 = vmatpush.msra.mxu0 0.0
        %439 = vmatpush.msra.mxu0 0.0
        %440 = vmatpush.msra.mxu0 0.0
        %441 = vmatpush.msra.mxu0 0.0
        %442 = vmatpush.msra.mxu0 0.0
        %443 = vmatpush.msra.mxu0 0.0
        %444 = vmatpush.msra.mxu0 0.0
        %445 = vmatpush.msra.mxu0 0.0
        %446 = vmatpush.msra.mxu0 0.0
        %447 = vmatpush.msra.mxu0 0.0
        %448 = vmatpush.msra.mxu0 0.0
        %449 = vmatpush.msra.mxu0 0.0
        %450 = vmatpush.msra.mxu0 0.0
        %451 = vmatpush.msra.mxu0 0.0
        %452 = vmatpush.msra.mxu0 %v368
        %453 = vmatmul.f32.gmra.mxu0 %v415
        %v454 = vpop.f32.mrf.mxu0
        %v455 = vadd.f32 %v412, %v454
        %456 = vdwg.mxu0
        %v457 = vld [vmem:[%s4] sm:$0xff]
        %459 = vset.pattern.permute.xlu0 0
        %460 = vperm.xlu0 %459, %v457
        %v461 = vpop.permute.xlu0 %460
        %v463 = vadd.f32 %v435, %v461
        %v464 = vadd.f32 %v455, %v461
        %v465 = vmax.f32 %v463, 0.0
        %v466 = vmax.f32 %v464, 0.0
        %v467 = vld [vmem:[%s5] sm:$0xff]
        %469 = vset.pattern.permute.xlu0 0
        %470 = vperm.xlu0 %469, %v467
        %v471 = vpop.permute.xlu0 %470
        %v473 = vmul.f32 %v465, %v471
        %v474 = vmul.f32 %v466, %v471
        %v475 = vrot.slane %v473, 4
        %v476 = vadd.f32 %v473, %v475
        %v477 = vrot.slane %v476, 2
        %v478 = vadd.f32 %v476, %v477
        %v479 = vrot.slane %v478, 1
        %v480 = vadd.f32 %v478, %v479
        %v481 = vrot.slane %v474, 4
        %v482 = vadd.f32 %v474, %v481
        %v483 = vrot.slane %v482, 2
        %v484 = vadd.f32 %v482, %v483
        %v485 = vrot.slane %v484, 1
        %v486 = vadd.f32 %v484, %v485
        %v487 = vld [vmem:[#allocation2] sm:$0x1]
        %489 = vset.pattern.permute.xlu0 0
        %490 = vperm.xlu0 %489, %v487
        %v491 = vpop.permute.xlu0 %490
        %v493 = vperm.slane %v491, 0
        %v494 = vadd.f32 %v480, %v493
        %v495 = vadd.f32 %v486, %v493
        %v496 = vxor.u32 %v494, 2147483648
        %v497 = vxor.u32 %v495, 2147483648
        %v498 = vmul.f32 %v496, 1.442695
        %v499 = vpow.pop %v498
        %v500 = vmul.f32 %v497, 1.442695
        %v501 = vpow.pop %v500
        %v502 = vadd.f32 %v499, 1.0
        %v503 = vadd.f32 %v501, 1.0
        %v504 = vrcp.pop %v502
        %v505 = vmul.f32 %v502, %v504
        %v506 = vsub.f32 1.0, %v505
        %v507 = vmul.f32 %v504, %v506
        %v508 = vadd.f32 %v504, %v507
        %vm509 = vweird.f32 %v502
        %vm510 = vweird.f32 %v504
        %vm511 = vmor %vm509, %vm510
        %v512 = vsel %vm511, %v504, %v508
        %v513 = vand.u32 2147483647, %v502
        %vm514 = vcmp.eq.f32.partialorder %v513, 8.507059e+37
        %v515 = vand.u32 %v502, 2147483648
        %v516 = vor.u32 1.1754944e-38, %v515
        %v517 = vsel %vm514, %v516, %v512
        %v518 = vmul.f32 1.0, %v517
        %v519 = vrcp.pop %v503
        %v520 = vmul.f32 %v503, %v519
        %v521 = vsub.f32 1.0, %v520
        %v522 = vmul.f32 %v519, %v521
        %v523 = vadd.f32 %v519, %v522
        %vm524 = vweird.f32 %v503
        %vm525 = vweird.f32 %v519
        %vm526 = vmor %vm524, %vm525
        %v527 = vsel %vm526, %v519, %v523
        %v528 = vand.u32 2147483647, %v503
        %vm529 = vcmp.eq.f32.partialorder %v528, 8.507059e+37
        %v530 = vand.u32 %v503, 2147483648
        %v531 = vor.u32 1.1754944e-38, %v530
        %v532 = vsel %vm529, %v531, %v527
        %v533 = vmul.f32 1.0, %v532
        %v534 = vmul.f32 %v518, %v364
        %v535 = vmul.f32 %v533, %v365
        %536 = vst [vmem:[%s360] sm:$0xff] %v534
        %537 = vst [vmem:[%s360 + $0x8] sm:$0xff] %v535
        %s538 = sand.u32 %s212, 1
        %s539 = scalar_lea.sflag [#allocation5], %s538
        %s540 = sand.u32 %s212, 1
        %s541 = smul.addr %s540, 16
        %s542 = scalar_lea.vmem [#allocation8], %s541
        // Predicated region
        $region57: #{tpu_custom_call.1} parent=47 // pred_check
          %p543 = pneg %p222
        $region58: #{tpu_custom_call.1} parent=47 // pred_check_branch
          %545 = sbr.rel (%p543) target = $region60
        $region59: #{tpu_custom_call.1} parent=47 // pred_region
          %s546 = smul.u32 2, %s34
          %548 = vsyncadd %s539, 0
          %s549 = smul.addr %s33, 2
          %s550 = sadd.s32 %s546, %s549
          %s551 = smul.addr %s550, 8
          %s552 = scalar_lea.hbm %s7, %s551
          %s554 = sshll.u32 %s542, 4
          %s555 = int_to_ptr.vmem [resolvable:$true] %s554
          %s556 = sshll.u32 %s552, 4
          %s557 = int_to_ptr.hbm [resolvable:$true] %s556
          %559 = dma.vmem_to_hbm [thread:$0]  %s555, 256, %s557, %s539
        $region60: #{tpu_custom_call.1} parent=47 // pred_fallthru
          _
      $region48: #{tpu_custom_call.1} parent=5 // pred_fallthru
        _
      %p560 = scmp.le.s32.totalorder 2, %s24
      // Predicated region
      $region61: #{tpu_custom_call.1} parent=5 // pred_check
        %p561 = pneg %p560
      $region62: #{tpu_custom_call.1} parent=5 // pred_check_branch
        %563 = sbr.rel (%p561) target = $region64
      $region63: #{tpu_custom_call.1} parent=5 // pred_region
        %s564 = ssub.s32 %s24, 2
        // Predicated region
        $region65: #{tpu_custom_call.1} parent=63 // pred_check
          %p565 = pneg %p228
        $region66: #{tpu_custom_call.1} parent=63 // pred_check_branch
          %567 = sbr.rel (%p565) target = $region68
        $region67: #{tpu_custom_call.1} parent=63 // pred_region
          %s568 = sand.u32 %s213, 1
          %s569 = scalar_lea.sflag [#allocation5], %s568
          %s570 = sand.u32 %s213, 1
          %s571 = smul.addr %s570, 16
          %s572 = scalar_lea.vmem [#allocation8], %s571
          %574 = dma.done %s569, 256
        $region68: #{tpu_custom_call.1} parent=63 // pred_fallthru
          _
      $region64: #{tpu_custom_call.1} parent=5 // pred_fallthru
        _
    $region6: #{tpu_custom_call.1} parent=1 // loop_footer
      %s28 = sadd.s32 1, %s24
    $region7: #{tpu_custom_call.1} parent=1 // loop_footer_branch
      %23 = sbr.rel target = $region3
    $region8: #{tpu_custom_call.1} parent=1 // loop_exit
      _
    %575 = vsyncpa [#allocation4], 1
    %s576 = scalar_lea.sflag [#allocation4], 1
    %577 = vsyncpa %s576, 1
    %578 = vsyncpa [#allocation7], 1
    %s579 = scalar_lea.sflag [#allocation7], 1
    %580 = vsyncpa %s579, 1
    %581 = vsyncpa [#allocation5], 1
    %s582 = scalar_lea.sflag [#allocation5], 1
    %583 = vsyncpa %s582, 1

</llo_original>
